<compile_context>
chip_gen: v5e
topology: v5e:2x2
jax: 0.10.0
libtpu: 0.0.40
codegen_flags: <defaults>
</compile_context>

<pallas_src>
import jax
import jax.numpy as jnp
from jax.experimental import pallas as pl
from jax.experimental.pallas import tpu as pltpu


def _round_up(n, m):
    return ((n + m - 1) // m) * m


def _mlp_kernel(x_ref,
                w1_ref, b1_ref,
                w2_ref, b2_ref,
                w3_ref, b3_ref,
                w4_ref, b4_ref,
                o_ref):
    """Fused 4-layer MLP forward for one batch tile (everything in VMEM).

    x tile / weights / intermediate activations are bf16 MXU operands; all
    accumulation, bias adds and ReLUs are f32 on the VPU.
    """
    x = x_ref[...]                                                   # bf16

    # encoder_hidden_layer -> drop1 (identity, eval) -> relu
    h = jnp.dot(x, w1_ref[...], preferred_element_type=jnp.float32) + b1_ref[...]
    h = jnp.maximum(h, 0.0).astype(jnp.bfloat16)

    # latent_layer -> drop2 (identity, eval) -> relu
    z = jnp.dot(h, w2_ref[...], preferred_element_type=jnp.float32) + b2_ref[...]
    z = jnp.maximum(z, 0.0).astype(jnp.bfloat16)

    # decoder_hidden_layer -> drop3 (identity, eval) -> relu
    d = jnp.dot(z, w3_ref[...], preferred_element_type=jnp.float32) + b3_ref[...]
    d = jnp.maximum(d, 0.0).astype(jnp.bfloat16)

    # decoder_output_layer (no activation), f32 output
    o_ref[...] = (jnp.dot(d, w4_ref[...], preferred_element_type=jnp.float32)
                  + b4_ref[...])


def autoencoder_forward(x, params, *, max_batch_tile=512):
    """Runs the fused AutoEncoder forward pass via pallas_call.

    x: (B, input_shape) array (cast to f32 like the PyTorch module does).
    params: dict with transposed f32 weights w1..w4 of shape (in, out) and
       biases b1..b4 of shape (1, out).
    """
    x = x.astype(jnp.float32)
    B, in_dim = x.shape
    hid_dim = params["w1"].shape[1]
    lat_dim = params["w2"].shape[1]
    out_dim = params["w4"].shape[1]

    # --- Lane-pad every feature dim to a multiple of 128 (zero padding keeps
    # the math identical: padded inputs are 0, padded weight cols/rows are 0,
    # padded biases are 0, so padded activations stay 0 and padded output
    # columns are sliced away).
    in_p = _round_up(in_dim, 128)
    hid_p = _round_up(hid_dim, 128)
    lat_p = _round_up(lat_dim, 128)
    out_p = _round_up(out_dim, 128)

    def pad_w(w, rp, cp):
        r, c = w.shape
        return jnp.pad(w, ((0, rp - r), (0, cp - c))).astype(jnp.bfloat16)

    def pad_b(b, cp):
        return jnp.pad(b, ((0, 0), (0, cp - b.shape[1]))).astype(jnp.float32)

    w1 = pad_w(params["w1"], in_p, hid_p)
    b1 = pad_b(params["b1"], hid_p)
    w2 = pad_w(params["w2"], hid_p, lat_p)
    b2 = pad_b(params["b2"], lat_p)
    w3 = pad_w(params["w3"], lat_p, hid_p)
    b3 = pad_b(params["b3"], hid_p)
    w4 = pad_w(params["w4"], hid_p, out_p)
    b4 = pad_b(params["b4"], out_p)

    # --- Batch tiling: biggest tile up to max_batch_tile. Toy batches become
    # a single grid step (no pipeline overhead); large batches use 512-row
    # tiles (multiple of 256 keeps v7x MXU passes full, and 512-row tiles sit
    # near the measured HBM-roofline sweet spot).
    batch_tile = min(_round_up(B, 8), max_batch_tile)
    B_p = _round_up(B, batch_tile)
    grid = (B_p // batch_tile,)

    x_p = jnp.pad(x, ((0, B_p - B), (0, in_p - in_dim))).astype(jnp.bfloat16)

    # --- Advisory cost estimate for XLA's scheduler.
    flops = 2 * B_p * (in_p * hid_p + hid_p * lat_p + lat_p * hid_p
                       + hid_p * out_p)
    bytes_accessed = (x_p.size * 2
                      + (w1.size + w2.size + w3.size + w4.size) * 2
                      + (b1.size + b2.size + b3.size + b4.size) * 4
                      + B_p * out_p * 4)
    cost = pl.CostEstimate(flops=flops, transcendentals=0,
                           bytes_accessed=bytes_accessed)

    # --- Explicit VMEM budget (weights may be double-buffered by the
    # pipeliner even with a constant index_map; x/out tiles are
    # double-buffered). Keep headroom but stay well under v7x's 64 MiB.
    vmem_needed = (
        2 * (w1.size + w2.size + w3.size + w4.size) * 2          # bf16 weights
        + 2 * (b1.size + b2.size + b3.size + b4.size) * 4        # f32 biases
        + 2 * batch_tile * in_p * 2                              # x tiles
        + 2 * batch_tile * out_p * 4                             # out tiles
        + batch_tile * (2 * hid_p + lat_p + out_p) * 4)          # activations
    vmem_limit = int(min(max(2 * vmem_needed, 4 << 20), 48 << 20))

    def full_spec(shape):
        # Whole-array block, same block for every batch tile (DMA'd once).
        return pl.BlockSpec(shape, lambda i: (0, 0))

    out_padded = pl.pallas_call(
        _mlp_kernel,
        out_shape=jax.ShapeDtypeStruct((B_p, out_p), jnp.float32),
        grid_spec=pltpu.PrefetchScalarGridSpec(
            num_scalar_prefetch=0,
            grid=grid,
            in_specs=[
                pl.BlockSpec((batch_tile, in_p), lambda i: (i, 0)),  # x tile
                full_spec(w1.shape), full_spec(b1.shape),
                full_spec(w2.shape), full_spec(b2.shape),
                full_spec(w3.shape), full_spec(b3.shape),
                full_spec(w4.shape), full_spec(b4.shape),
            ],
            out_specs=pl.BlockSpec((batch_tile, out_p), lambda i: (i, 0)),
        ),
        compiler_params=pltpu.CompilerParams(
            dimension_semantics=("parallel",),
            vmem_limit_bytes=vmem_limit),
        cost_estimate=cost,
    )(x_p, w1, b1, w2, b2, w3, b3, w4, b4)

    # Slice back to the logical (unpadded) shape.
    return out_padded[:B, :out_dim]


def init_params(key, input_shape, hidden_shape, latent_shape, output_shape):
    """Deterministic init mimicking nn.Linear default (U[-1/sqrt(in), 1/sqrt(in)]).

    Weights are stored pre-transposed as (in_features, out_features); biases
    as (1, out_features) so everything stays >= 2-D for TPU layout.
    """
    dims = [
        (input_shape, hidden_shape),    # encoder_hidden_layer
        (hidden_shape, latent_shape),   # latent_layer
        (latent_shape, hidden_shape),   # decoder_hidden_layer
        (hidden_shape, output_shape),   # decoder_output_layer
    ]
    params = {}
    for idx, (fan_in, fan_out) in enumerate(dims, start=1):
        key, kw, kb = jax.random.split(key, 3)
        bound = 1.0 / jnp.sqrt(jnp.float32(fan_in))
        params[f"w{idx}"] = jax.random.uniform(
            kw, (fan_in, fan_out), jnp.float32, -bound, bound)
        params[f"b{idx}"] = jax.random.uniform(
            kb, (1, fan_out), jnp.float32, -bound, bound)
    return params


def _reference_forward(x, params):
    """Pure-JAX f32 reference (eval-mode dropout = identity)."""
    x = x.astype(jnp.float32)
    h = jnp.maximum(x @ params["w1"] + params["b1"], 0.0)
    z = jnp.maximum(h @ params["w2"] + params["b2"], 0.0)
    d = jnp.maximum(z @ params["w3"] + params["b3"], 0.0)
    return d @ params["w4"] + params["b4"]


if __name__ == "__main__":
    # Small shapes consistent with the module's kwargs.
    INPUT_SHAPE = 16
    HIDDEN_SHAPE = 32
    LATENT_SHAPE = 8
    OUTPUT_SHAPE = 16
    BATCH = 16

    key = jax.random.PRNGKey(0)
    key, kx = jax.random.split(key)
    x = jax.random.normal(kx, (BATCH, INPUT_SHAPE), jnp.float32)

    params = init_params(key, INPUT_SHAPE, HIDDEN_SHAPE, LATENT_SHAPE,
                         OUTPUT_SHAPE)

    out = autoencoder_forward(x, params)
    out = jax.block_until_ready(out)

    ref = _reference_forward(x, params)
    assert out.shape == (BATCH, OUTPUT_SHAPE)
    assert out.dtype == jnp.float32
    # Tolerance accounts for bf16 rounding of the MXU operands (accumulation
    # is still f32).
    assert jnp.allclose(out, ref, atol=2e-2, rtol=2e-2), "mismatch vs reference"

    print("KERNEL_OK")
</pallas_src>

<mosaic_0001>
module attributes {stable_mosaic.version = 11 : i64} {
  func.func @_mlp_kernel(%arg0: i32, %arg1: memref<16x128xbf16, #tpu.memory_space<vmem>>, %arg2: memref<128x128xbf16, #tpu.memory_space<vmem>>, %arg3: memref<1x128xf32, #tpu.memory_space<vmem>>, %arg4: memref<128x128xbf16, #tpu.memory_space<vmem>>, %arg5: memref<1x128xf32, #tpu.memory_space<vmem>>, %arg6: memref<128x128xbf16, #tpu.memory_space<vmem>>, %arg7: memref<1x128xf32, #tpu.memory_space<vmem>>, %arg8: memref<128x128xbf16, #tpu.memory_space<vmem>>, %arg9: memref<1x128xf32, #tpu.memory_space<vmem>>, %arg10: memref<16x128xf32, #tpu.memory_space<vmem>>) attributes {dimension_semantics = [#tpu.dimension_semantics<parallel>], iteration_bounds = array<i64: 1>, scalar_prefetch = 0 : i64, scratch_operands = 0 : i64, tpu.core_type = #tpu.core_type<tc>, window_params = [{transform_indices = @transform_0, window_bounds = array<i64: 16, 128>}, {pipeline_mode = #tpu.pipeline_mode<synchronous>, transform_indices = @transform_1, window_bounds = array<i64: 128, 128>}, {pipeline_mode = #tpu.pipeline_mode<synchronous>, transform_indices = @transform_2, window_bounds = array<i64: 1, 128>}, {pipeline_mode = #tpu.pipeline_mode<synchronous>, transform_indices = @transform_3, window_bounds = array<i64: 128, 128>}, {pipeline_mode = #tpu.pipeline_mode<synchronous>, transform_indices = @transform_4, window_bounds = array<i64: 1, 128>}, {pipeline_mode = #tpu.pipeline_mode<synchronous>, transform_indices = @transform_5, window_bounds = array<i64: 128, 128>}, {pipeline_mode = #tpu.pipeline_mode<synchronous>, transform_indices = @transform_6, window_bounds = array<i64: 1, 128>}, {pipeline_mode = #tpu.pipeline_mode<synchronous>, transform_indices = @transform_7, window_bounds = array<i64: 128, 128>}, {pipeline_mode = #tpu.pipeline_mode<synchronous>, transform_indices = @transform_8, window_bounds = array<i64: 1, 128>}, {transform_indices = @transform_9, window_bounds = array<i64: 16, 128>}]} {
    %c0 = arith.constant 0 : index
    %c0_0 = arith.constant 0 : index
    %0 = vector.load %arg1[%c0, %c0_0] : memref<16x128xbf16, #tpu.memory_space<vmem>>, vector<16x128xbf16>
    %c0_1 = arith.constant 0 : index
    %c0_2 = arith.constant 0 : index
    %1 = vector.load %arg2[%c0_1, %c0_2] : memref<128x128xbf16, #tpu.memory_space<vmem>>, vector<128x128xbf16>
    %cst = arith.constant dense<0.000000e+00> : vector<16x128xf32>
    %2 = tpu.matmul %0, %1, %cst {dimension_numbers = #tpu.dot_dimension_numbers<[1], [0], [0], [1], [0, 0, 1, 1], [], []>} : vector<16x128xbf16>, vector<128x128xbf16>, vector<16x128xf32> -> vector<16x128xf32>
    %c0_3 = arith.constant 0 : index
    %c0_4 = arith.constant 0 : index
    %3 = vector.load %arg3[%c0_3, %c0_4] : memref<1x128xf32, #tpu.memory_space<vmem>>, vector<1x128xf32>
    %4 = vector.broadcast %3 : vector<1x128xf32> to vector<16x128xf32>
    %5 = arith.addf %2, %4 : vector<16x128xf32>
    %cst_5 = arith.constant 0.000000e+00 : f32
    %6 = vector.broadcast %cst_5 : f32 to vector<16x128xf32>
    %7 = arith.maximumf %5, %6 : vector<16x128xf32>
    %8 = arith.truncf %7 : vector<16x128xf32> to vector<16x128xbf16>
    %c0_6 = arith.constant 0 : index
    %c0_7 = arith.constant 0 : index
    %9 = vector.load %arg4[%c0_6, %c0_7] : memref<128x128xbf16, #tpu.memory_space<vmem>>, vector<128x128xbf16>
    %cst_8 = arith.constant dense<0.000000e+00> : vector<16x128xf32>
    %10 = tpu.matmul %8, %9, %cst_8 {dimension_numbers = #tpu.dot_dimension_numbers<[1], [0], [0], [1], [0, 0, 1, 1], [], []>} : vector<16x128xbf16>, vector<128x128xbf16>, vector<16x128xf32> -> vector<16x128xf32>
    %c0_9 = arith.constant 0 : index
    %c0_10 = arith.constant 0 : index
    %11 = vector.load %arg5[%c0_9, %c0_10] : memref<1x128xf32, #tpu.memory_space<vmem>>, vector<1x128xf32>
    %12 = vector.broadcast %11 : vector<1x128xf32> to vector<16x128xf32>
    %13 = arith.addf %10, %12 : vector<16x128xf32>
    %cst_11 = arith.constant 0.000000e+00 : f32
    %14 = vector.broadcast %cst_11 : f32 to vector<16x128xf32>
    %15 = arith.maximumf %13, %14 : vector<16x128xf32>
    %16 = arith.truncf %15 : vector<16x128xf32> to vector<16x128xbf16>
    %c0_12 = arith.constant 0 : index
    %c0_13 = arith.constant 0 : index
    %17 = vector.load %arg6[%c0_12, %c0_13] : memref<128x128xbf16, #tpu.memory_space<vmem>>, vector<128x128xbf16>
    %cst_14 = arith.constant dense<0.000000e+00> : vector<16x128xf32>
    %18 = tpu.matmul %16, %17, %cst_14 {dimension_numbers = #tpu.dot_dimension_numbers<[1], [0], [0], [1], [0, 0, 1, 1], [], []>} : vector<16x128xbf16>, vector<128x128xbf16>, vector<16x128xf32> -> vector<16x128xf32>
    %c0_15 = arith.constant 0 : index
    %c0_16 = arith.constant 0 : index
    %19 = vector.load %arg7[%c0_15, %c0_16] : memref<1x128xf32, #tpu.memory_space<vmem>>, vector<1x128xf32>
    %20 = vector.broadcast %19 : vector<1x128xf32> to vector<16x128xf32>
    %21 = arith.addf %18, %20 : vector<16x128xf32>
    %cst_17 = arith.constant 0.000000e+00 : f32
    %22 = vector.broadcast %cst_17 : f32 to vector<16x128xf32>
    %23 = arith.maximumf %21, %22 : vector<16x128xf32>
    %24 = arith.truncf %23 : vector<16x128xf32> to vector<16x128xbf16>
    %c0_18 = arith.constant 0 : index
    %c0_19 = arith.constant 0 : index
    %25 = vector.load %arg8[%c0_18, %c0_19] : memref<128x128xbf16, #tpu.memory_space<vmem>>, vector<128x128xbf16>
    %cst_20 = arith.constant dense<0.000000e+00> : vector<16x128xf32>
    %26 = tpu.matmul %24, %25, %cst_20 {dimension_numbers = #tpu.dot_dimension_numbers<[1], [0], [0], [1], [0, 0, 1, 1], [], []>} : vector<16x128xbf16>, vector<128x128xbf16>, vector<16x128xf32> -> vector<16x128xf32>
    %c0_21 = arith.constant 0 : index
    %c0_22 = arith.constant 0 : index
    %27 = vector.load %arg9[%c0_21, %c0_22] : memref<1x128xf32, #tpu.memory_space<vmem>>, vector<1x128xf32>
    %28 = vector.broadcast %27 : vector<1x128xf32> to vector<16x128xf32>
    %29 = arith.addf %26, %28 : vector<16x128xf32>
    %c0_23 = arith.constant 0 : index
    %c0_24 = arith.constant 0 : index
    %30 = vector.load %arg10[%c0_23, %c0_24] : memref<16x128xf32, #tpu.memory_space<vmem>>, vector<16x128xf32>
    tpu.vector_store %arg10[%c0_23, %c0_24], %29 {strides = array<i32>} : memref<16x128xf32, #tpu.memory_space<vmem>>, vector<16x128xf32>,
    return
  }
  func.func @transform_0(%arg0: i32) -> (i32, i32) {
    %c0_i32 = arith.constant 0 : i32
    %c0_i32_0 = arith.constant 0 : i32
    return %arg0, %c0_i32 : i32, i32
  }
  func.func @transform_1(%arg0: i32) -> (i32, i32) {
    %c0_i32 = arith.constant 0 : i32
    %c0_i32_0 = arith.constant 0 : i32
    %c0_i32_1 = arith.constant 0 : i32
    return %c0_i32, %c0_i32_0 : i32, i32
  }
  func.func @transform_2(%arg0: i32) -> (i32, i32) {
    %c0_i32 = arith.constant 0 : i32
    %c0_i32_0 = arith.constant 0 : i32
    %c0_i32_1 = arith.constant 0 : i32
    return %c0_i32, %c0_i32_0 : i32, i32
  }
  func.func @transform_3(%arg0: i32) -> (i32, i32) {
    %c0_i32 = arith.constant 0 : i32
    %c0_i32_0 = arith.constant 0 : i32
    %c0_i32_1 = arith.constant 0 : i32
    return %c0_i32, %c0_i32_0 : i32, i32
  }
  func.func @transform_4(%arg0: i32) -> (i32, i32) {
    %c0_i32 = arith.constant 0 : i32
    %c0_i32_0 = arith.constant 0 : i32
    %c0_i32_1 = arith.constant 0 : i32
    return %c0_i32, %c0_i32_0 : i32, i32
  }
  func.func @transform_5(%arg0: i32) -> (i32, i32) {
    %c0_i32 = arith.constant 0 : i32
    %c0_i32_0 = arith.constant 0 : i32
    %c0_i32_1 = arith.constant 0 : i32
    return %c0_i32, %c0_i32_0 : i32, i32
  }
  func.func @transform_6(%arg0: i32) -> (i32, i32) {
    %c0_i32 = arith.constant 0 : i32
    %c0_i32_0 = arith.constant 0 : i32
    %c0_i32_1 = arith.constant 0 : i32
    return %c0_i32, %c0_i32_0 : i32, i32
  }
  func.func @transform_7(%arg0: i32) -> (i32, i32) {
    %c0_i32 = arith.constant 0 : i32
    %c0_i32_0 = arith.constant 0 : i32
    %c0_i32_1 = arith.constant 0 : i32
    return %c0_i32, %c0_i32_0 : i32, i32
  }
  func.func @transform_8(%arg0: i32) -> (i32, i32) {
    %c0_i32 = arith.constant 0 : i32
    %c0_i32_0 = arith.constant 0 : i32
    %c0_i32_1 = arith.constant 0 : i32
    return %c0_i32, %c0_i32_0 : i32, i32
  }
  func.func @transform_9(%arg0: i32) -> (i32, i32) {
    %c0_i32 = arith.constant 0 : i32
    %c0_i32_0 = arith.constant 0 : i32
    return %arg0, %c0_i32 : i32, i32
  }
}

</mosaic_0001>

<llo_original>
// kernel: tpu_custom_call.1
$region0: #{tpu_custom_call.1}
  #allocation0 [shape = 'u32[]', space=smem, size = 0x4, offset = 0x4, fixed_abs, tag = 'smem constant byte address 0x4 - core index']
  #allocation1 [shape = 'u32[72,128]{1,0:T(1,128)}', space=vmem, size = 0x9000, scoped, tag = 'internal scratch']
  %s0 = inlined_call_operand.hbm [shape: bf16[16,128], index: 0, kind: input, shape index: {}]
  %s1 = inlined_call_operand.hbm [shape: bf16[128,128], index: 1, kind: input, shape index: {}]
  %s2 = inlined_call_operand.vmem [shape: f32[1,128], index: 2, kind: input, shape index: {}]
  %s3 = inlined_call_operand.hbm [shape: bf16[128,128], index: 3, kind: input, shape index: {}]
  %s4 = inlined_call_operand.vmem [shape: f32[1,128], index: 4, kind: input, shape index: {}]
  %s5 = inlined_call_operand.hbm [shape: bf16[128,128], index: 5, kind: input, shape index: {}]
  %s6 = inlined_call_operand.vmem [shape: f32[1,128], index: 6, kind: input, shape index: {}]
  %s7 = inlined_call_operand.hbm [shape: bf16[128,128], index: 7, kind: input, shape index: {}]
  %s8 = inlined_call_operand.vmem [shape: f32[1,128], index: 8, kind: input, shape index: {}]
  %s9 = inlined_call_operand.hbm [shape: f32[16,128], index: 9, kind: output, shape index: {}]
  %s10 = sld [smem:[#allocation0]]
  $region66: #{tpu_custom_call.1} parent=0
    _
  %s12 = ssub.s32 1, %s10
  %s13 = scalar_select 0, %s12, %s10
  $region1: #{tpu_custom_call.1} parent=0
    #allocation2 [shape = 'u8[4096]{0}', space=vmem, size = 0x1000, scoped, tag = 'input window, operand 0, single buffered']
    #allocation3 [shape = 's32[1]{0}', space=sflag, size = 0x4, scoped, tag = 'scoped memory for tpu_custom_call.1']
    #allocation4 [shape = 's32[1]{0}', space=sflag, size = 0x4, scoped, tag = 'scoped memory for tpu_custom_call.1']
    #allocation5 [shape = 'u8[32768]{0}', space=vmem, size = 0x8000, scoped, tag = 'input window, operand 1, single buffered']
    #allocation6 [shape = 's32[1]{0}', space=sflag, size = 0x4, scoped, tag = 'scoped memory for tpu_custom_call.1']
    #allocation7 [shape = 'u8[32768]{0}', space=vmem, size = 0x8000, scoped, tag = 'input window, operand 3, single buffered']
    #allocation8 [shape = 'u8[32768]{0}', space=vmem, size = 0x8000, scoped, tag = 'input window, operand 5, single buffered']
    #allocation9 [shape = 's32[1]{0}', space=sflag, size = 0x4, scoped, tag = 'scoped memory for tpu_custom_call.1']
    #allocation10 [shape = 'u8[32768]{0}', space=vmem, size = 0x8000, scoped, tag = 'input window, operand 7, single buffered']
    #allocation11 [shape = 'u8[8192]{0}', space=vmem, size = 0x2000, scoped, tag = 'output window, operand 0, single buffered']
    %14 = vsyncpa [#allocation3], 0
    %15 = vsyncpa [#allocation6], 0
    %16 = vsyncpa [#allocation9], 0
    %17 = vsyncpa [#allocation4], 0
    // Predicated region
    $region2: #{tpu_custom_call.1} parent=1 // pred_check
      _
    $region3: #{tpu_custom_call.1} parent=1 // pred_check_branch
      %19 = sbr.rel (0) target = $region5
    $region4: #{tpu_custom_call.1} parent=1 // pred_region
      %21 = vsyncadd [#allocation3], 0
      %s22 = sshll.u32 %s0, 4
      %s23 = int_to_ptr.hbm [resolvable:$true] %s22
      %s24 = sshll.u32 [#allocation2], 4
      %s25 = int_to_ptr.vmem [resolvable:$true] %s24
      %30 = dma.hbm_to_vmem [thread:$0]  %s23, 128, %s25, [#allocation3], 64, 64, 4
    $region5: #{tpu_custom_call.1} parent=1 // pred_fallthru
      _
    // Predicated region
    $region6: #{tpu_custom_call.1} parent=1 // pred_check
      _
    $region7: #{tpu_custom_call.1} parent=1 // pred_check_branch
      %32 = sbr.rel (0) target = $region9
    $region8: #{tpu_custom_call.1} parent=1 // pred_region
      %34 = vsyncadd [#allocation6], 0
      %s35 = sshll.u32 %s1, 4
      %s36 = int_to_ptr.hbm [resolvable:$true] %s35
      %s37 = sshll.u32 [#allocation5], 4
      %s38 = int_to_ptr.vmem [resolvable:$true] %s37
      %43 = dma.hbm_to_vmem [thread:$0]  %s36, 1024, %s38, [#allocation6], 64, 64, 4
    $region9: #{tpu_custom_call.1} parent=1 // pred_fallthru
      _
    // Predicated region
    $region10: #{tpu_custom_call.1} parent=1 // pred_check
      _
    $region11: #{tpu_custom_call.1} parent=1 // pred_check_branch
      %45 = sbr.rel (0) target = $region13
    $region12: #{tpu_custom_call.1} parent=1 // pred_region
      _
    $region13: #{tpu_custom_call.1} parent=1 // pred_fallthru
      _
    // Predicated region
    $region14: #{tpu_custom_call.1} parent=1 // pred_check
      _
    $region15: #{tpu_custom_call.1} parent=1 // pred_check_branch
      %47 = sbr.rel (0) target = $region17
    $region16: #{tpu_custom_call.1} parent=1 // pred_region
      %49 = vsyncadd [#allocation6], 0
      %s50 = sshll.u32 %s3, 4
      %s51 = int_to_ptr.hbm [resolvable:$true] %s50
      %s52 = sshll.u32 [#allocation7], 4
      %s53 = int_to_ptr.vmem [resolvable:$true] %s52
      %58 = dma.hbm_to_vmem [thread:$0]  %s51, 1024, %s53, [#allocation6], 64, 64, 4
    $region17: #{tpu_custom_call.1} parent=1 // pred_fallthru
      _
    // Predicated region
    $region18: #{tpu_custom_call.1} parent=1 // pred_check
      _
    $region19: #{tpu_custom_call.1} parent=1 // pred_check_branch
      %60 = sbr.rel (0) target = $region21
    $region20: #{tpu_custom_call.1} parent=1 // pred_region
      _
    $region21: #{tpu_custom_call.1} parent=1 // pred_fallthru
      _
    // Predicated region
    $region22: #{tpu_custom_call.1} parent=1 // pred_check
      _
    $region23: #{tpu_custom_call.1} parent=1 // pred_check_branch
      %62 = sbr.rel (0) target = $region25
    $region24: #{tpu_custom_call.1} parent=1 // pred_region
      %64 = vsyncadd [#allocation9], 0
      %s65 = sshll.u32 %s5, 4
      %s66 = int_to_ptr.hbm [resolvable:$true] %s65
      %s67 = sshll.u32 [#allocation8], 4
      %s68 = int_to_ptr.vmem [resolvable:$true] %s67
      %73 = dma.hbm_to_vmem [thread:$0]  %s66, 1024, %s68, [#allocation9], 64, 64, 4
    $region25: #{tpu_custom_call.1} parent=1 // pred_fallthru
      _
    // Predicated region
    $region26: #{tpu_custom_call.1} parent=1 // pred_check
      _
    $region27: #{tpu_custom_call.1} parent=1 // pred_check_branch
      %75 = sbr.rel (0) target = $region29
    $region28: #{tpu_custom_call.1} parent=1 // pred_region
      _
    $region29: #{tpu_custom_call.1} parent=1 // pred_fallthru
      _
    // Predicated region
    $region30: #{tpu_custom_call.1} parent=1 // pred_check
      _
    $region31: #{tpu_custom_call.1} parent=1 // pred_check_branch
      %77 = sbr.rel (0) target = $region33
    $region32: #{tpu_custom_call.1} parent=1 // pred_region
      %79 = vsyncadd [#allocation9], 0
      %s80 = sshll.u32 %s7, 4
      %s81 = int_to_ptr.hbm [resolvable:$true] %s80
      %s82 = sshll.u32 [#allocation10], 4
      %s83 = int_to_ptr.vmem [resolvable:$true] %s82
      %88 = dma.hbm_to_vmem [thread:$0]  %s81, 1024, %s83, [#allocation9], 64, 64, 4
    $region33: #{tpu_custom_call.1} parent=1 // pred_fallthru
      _
    // Predicated region
    $region34: #{tpu_custom_call.1} parent=1 // pred_check
      _
    $region35: #{tpu_custom_call.1} parent=1 // pred_check_branch
      %90 = sbr.rel (0) target = $region37
    $region36: #{tpu_custom_call.1} parent=1 // pred_region
      _
    $region37: #{tpu_custom_call.1} parent=1 // pred_fallthru
      _
    // Predicated region
    $region38: #{tpu_custom_call.1} parent=1 // pred_check
      _
    $region39: #{tpu_custom_call.1} parent=1 // pred_check_branch
      %92 = sbr.rel (0) target = $region41
    $region40: #{tpu_custom_call.1} parent=1 // pred_region
      %94 = dma.done [#allocation3], 128
    $region41: #{tpu_custom_call.1} parent=1 // pred_fallthru
      _
    // Predicated region
    $region42: #{tpu_custom_call.1} parent=1 // pred_check
      _
    $region43: #{tpu_custom_call.1} parent=1 // pred_check_branch
      %96 = sbr.rel (0) target = $region45
    $region44: #{tpu_custom_call.1} parent=1 // pred_region
      %98 = dma.done [#allocation6], 1024
    $region45: #{tpu_custom_call.1} parent=1 // pred_fallthru
      _
    // Predicated region
    $region46: #{tpu_custom_call.1} parent=1 // pred_check
      _
    $region47: #{tpu_custom_call.1} parent=1 // pred_check_branch
      %100 = sbr.rel (0) target = $region49
    $region48: #{tpu_custom_call.1} parent=1 // pred_region
      %102 = dma.done [#allocation6], 1024
    $region49: #{tpu_custom_call.1} parent=1 // pred_fallthru
      _
    // Predicated region
    $region50: #{tpu_custom_call.1} parent=1 // pred_check
      _
    $region51: #{tpu_custom_call.1} parent=1 // pred_check_branch
      %104 = sbr.rel (0) target = $region53
    $region52: #{tpu_custom_call.1} parent=1 // pred_region
      %106 = dma.done [#allocation9], 1024
    $region53: #{tpu_custom_call.1} parent=1 // pred_fallthru
      _
    // Predicated region
    $region54: #{tpu_custom_call.1} parent=1 // pred_check
      _
    $region55: #{tpu_custom_call.1} parent=1 // pred_check_branch
      %108 = sbr.rel (0) target = $region57
    $region56: #{tpu_custom_call.1} parent=1 // pred_region
      %110 = dma.done [#allocation9], 1024
    $region57: #{tpu_custom_call.1} parent=1 // pred_fallthru
      _
    %v111 = vld [vmem:[#allocation2] sm:$0xf]
    %v112 = vld [vmem:[#allocation2 + $0x4] sm:$0xf]
    %v113 = vld [vmem:[#allocation5] sm:$0xf]
    %v114 = vld [vmem:[#allocation5 + $0x4] sm:$0xf]
    %v115 = vld [vmem:[#allocation5 + $0x8] sm:$0xf]
    %v116 = vld [vmem:[#allocation5 + $0xc] sm:$0xf]
    %v117 = vld [vmem:[#allocation5 + $0x10] sm:$0xf]
    %v118 = vld [vmem:[#allocation5 + $0x14] sm:$0xf]
    %v119 = vld [vmem:[#allocation5 + $0x18] sm:$0xf]
    %v120 = vld [vmem:[#allocation5 + $0x1c] sm:$0xf]
    %v121 = vld [vmem:[#allocation5 + $0x20] sm:$0xf]
    %v122 = vld [vmem:[#allocation5 + $0x24] sm:$0xf]
    %v123 = vld [vmem:[#allocation5 + $0x28] sm:$0xf]
    %v124 = vld [vmem:[#allocation5 + $0x2c] sm:$0xf]
    %v125 = vld [vmem:[#allocation5 + $0x30] sm:$0xf]
    %v126 = vld [vmem:[#allocation5 + $0x34] sm:$0xf]
    %v127 = vld [vmem:[#allocation5 + $0x38] sm:$0xf]
    %v128 = vld [vmem:[#allocation5 + $0x3c] sm:$0xf]
    %v129 = vld [vmem:[%s2] sm:$0x1]
    %v131 = vperm.slane %v129, 0
    %v135 = vunpack.c.l.b16 %v111
    %v136 = vunpack.c.l.b16 %v112
    %v137 = vpack.c.b16 %v136, %v135
    %v155 = vunpack.c.l.b16 %v113
    %v156 = vunpack.c.l.b16 %v114
    %v157 = vunpack.c.l.b16 %v115
    %v158 = vunpack.c.l.b16 %v116
    %v159 = vunpack.c.l.b16 %v117
    %v160 = vunpack.c.l.b16 %v118
    %v161 = vunpack.c.l.b16 %v119
    %v162 = vunpack.c.l.b16 %v120
    %v163 = vunpack.c.l.b16 %v121
    %v164 = vunpack.c.l.b16 %v122
    %v165 = vunpack.c.l.b16 %v123
    %v166 = vunpack.c.l.b16 %v124
    %v167 = vunpack.c.l.b16 %v125
    %v168 = vunpack.c.l.b16 %v126
    %v169 = vunpack.c.l.b16 %v127
    %v170 = vunpack.c.l.b16 %v128
    %v171 = vpack.c.b16 %v156, %v155
    %v172 = vpack.c.b16 %v158, %v157
    %v173 = vpack.c.b16 %v160, %v159
    %v174 = vpack.c.b16 %v162, %v161
    %v175 = vpack.c.b16 %v164, %v163
    %v176 = vpack.c.b16 %v166, %v165
    %v177 = vpack.c.b16 %v168, %v167
    %v178 = vpack.c.b16 %v170, %v169
    %187 = vmatpush.bf16.msra.mxu0 %v178
    %188 = vmatpush.bf16.msra.mxu0 %v177
    %189 = vmatpush.bf16.msra.mxu0 %v176
    %190 = vmatpush.bf16.msra.mxu0 %v175
    %191 = vmatpush.bf16.msra.mxu0 %v174
    %192 = vmatpush.bf16.msra.mxu0 %v173
    %193 = vmatpush.bf16.msra.mxu0 %v172
    %194 = vmatpush.bf16.msra.mxu0 %v171
    %195 = vmatmul.bf16.gmra.mxu0 %v137
    %v196 = vpop.f32.mrf.mxu0
    %v197 = vadd.f32 %v131, %v196
    %v198 = vpop.f32.mrf.mxu0
    %v199 = vadd.f32 %v131, %v198
    %200 = vdwg.mxu0
    %v201 = vmax.f32 %v197, 0.0
    %v202 = vmax.f32 %v199, 0.0
    %v203 = vpack.c.bf16 %v202, %v201
    %v204 = vld [vmem:[#allocation7] sm:$0xf]
    %v205 = vld [vmem:[#allocation7 + $0x4] sm:$0xf]
    %v206 = vld [vmem:[#allocation7 + $0x8] sm:$0xf]
    %v207 = vld [vmem:[#allocation7 + $0xc] sm:$0xf]
    %v208 = vld [vmem:[#allocation7 + $0x10] sm:$0xf]
    %v209 = vld [vmem:[#allocation7 + $0x14] sm:$0xf]
    %v210 = vld [vmem:[#allocation7 + $0x18] sm:$0xf]
    %v211 = vld [vmem:[#allocation7 + $0x1c] sm:$0xf]
    %v212 = vld [vmem:[#allocation7 + $0x20] sm:$0xf]
    %v213 = vld [vmem:[#allocation7 + $0x24] sm:$0xf]
    %v214 = vld [vmem:[#allocation7 + $0x28] sm:$0xf]
    %v215 = vld [vmem:[#allocation7 + $0x2c] sm:$0xf]
    %v216 = vld [vmem:[#allocation7 + $0x30] sm:$0xf]
    %v217 = vld [vmem:[#allocation7 + $0x34] sm:$0xf]
    %v218 = vld [vmem:[#allocation7 + $0x38] sm:$0xf]
    %v219 = vld [vmem:[#allocation7 + $0x3c] sm:$0xf]
    %v220 = vld [vmem:[%s4] sm:$0x1]
    %v222 = vperm.slane %v220, 0
    %v240 = vunpack.c.l.b16 %v204
    %v241 = vunpack.c.l.b16 %v205
    %v242 = vunpack.c.l.b16 %v206
    %v243 = vunpack.c.l.b16 %v207
    %v244 = vunpack.c.l.b16 %v208
    %v245 = vunpack.c.l.b16 %v209
    %v246 = vunpack.c.l.b16 %v210
    %v247 = vunpack.c.l.b16 %v211
    %v248 = vunpack.c.l.b16 %v212
    %v249 = vunpack.c.l.b16 %v213
    %v250 = vunpack.c.l.b16 %v214
    %v251 = vunpack.c.l.b16 %v215
    %v252 = vunpack.c.l.b16 %v216
    %v253 = vunpack.c.l.b16 %v217
    %v254 = vunpack.c.l.b16 %v218
    %v255 = vunpack.c.l.b16 %v219
    %v256 = vpack.c.b16 %v241, %v240
    %v257 = vpack.c.b16 %v243, %v242
    %v258 = vpack.c.b16 %v245, %v244
    %v259 = vpack.c.b16 %v247, %v246
    %v260 = vpack.c.b16 %v249, %v248
    %v261 = vpack.c.b16 %v251, %v250
    %v262 = vpack.c.b16 %v253, %v252
    %v263 = vpack.c.b16 %v255, %v254
    %272 = vmatpush.bf16.msra.mxu0 %v263
    %273 = vmatpush.bf16.msra.mxu0 %v262
    %274 = vmatpush.bf16.msra.mxu0 %v261
    %275 = vmatpush.bf16.msra.mxu0 %v260
    %276 = vmatpush.bf16.msra.mxu0 %v259
    %277 = vmatpush.bf16.msra.mxu0 %v258
    %278 = vmatpush.bf16.msra.mxu0 %v257
    %279 = vmatpush.bf16.msra.mxu0 %v256
    %280 = vmatmul.bf16.gmra.mxu0 %v203
    %v281 = vpop.f32.mrf.mxu0
    %v282 = vadd.f32 %v222, %v281
    %v283 = vpop.f32.mrf.mxu0
    %v284 = vadd.f32 %v222, %v283
    %285 = vdwg.mxu0
    %v286 = vmax.f32 %v282, 0.0
    %v287 = vmax.f32 %v284, 0.0
    %v288 = vpack.c.bf16 %v287, %v286
    %v289 = vld [vmem:[#allocation8] sm:$0xf]
    %v290 = vld [vmem:[#allocation8 + $0x4] sm:$0xf]
    %v291 = vld [vmem:[#allocation8 + $0x8] sm:$0xf]
    %v292 = vld [vmem:[#allocation8 + $0xc] sm:$0xf]
    %v293 = vld [vmem:[#allocation8 + $0x10] sm:$0xf]
    %v294 = vld [vmem:[#allocation8 + $0x14] sm:$0xf]
    %v295 = vld [vmem:[#allocation8 + $0x18] sm:$0xf]
    %v296 = vld [vmem:[#allocation8 + $0x1c] sm:$0xf]
    %v297 = vld [vmem:[#allocation8 + $0x20] sm:$0xf]
    %v298 = vld [vmem:[#allocation8 + $0x24] sm:$0xf]
    %v299 = vld [vmem:[#allocation8 + $0x28] sm:$0xf]
    %v300 = vld [vmem:[#allocation8 + $0x2c] sm:$0xf]
    %v301 = vld [vmem:[#allocation8 + $0x30] sm:$0xf]
    %v302 = vld [vmem:[#allocation8 + $0x34] sm:$0xf]
    %v303 = vld [vmem:[#allocation8 + $0x38] sm:$0xf]
    %v304 = vld [vmem:[#allocation8 + $0x3c] sm:$0xf]
    %v305 = vld [vmem:[%s6] sm:$0x1]
    %v307 = vperm.slane %v305, 0
    %v325 = vunpack.c.l.b16 %v289
    %v326 = vunpack.c.l.b16 %v290
    %v327 = vunpack.c.l.b16 %v291
    %v328 = vunpack.c.l.b16 %v292
    %v329 = vunpack.c.l.b16 %v293
    %v330 = vunpack.c.l.b16 %v294
    %v331 = vunpack.c.l.b16 %v295
    %v332 = vunpack.c.l.b16 %v296
    %v333 = vunpack.c.l.b16 %v297
    %v334 = vunpack.c.l.b16 %v298
    %v335 = vunpack.c.l.b16 %v299
    %v336 = vunpack.c.l.b16 %v300
    %v337 = vunpack.c.l.b16 %v301
    %v338 = vunpack.c.l.b16 %v302
    %v339 = vunpack.c.l.b16 %v303
    %v340 = vunpack.c.l.b16 %v304
    %v341 = vpack.c.b16 %v326, %v325
    %v342 = vpack.c.b16 %v328, %v327
    %v343 = vpack.c.b16 %v330, %v329
    %v344 = vpack.c.b16 %v332, %v331
    %v345 = vpack.c.b16 %v334, %v333
    %v346 = vpack.c.b16 %v336, %v335
    %v347 = vpack.c.b16 %v338, %v337
    %v348 = vpack.c.b16 %v340, %v339
    %357 = vmatpush.bf16.msra.mxu0 %v348
    %358 = vmatpush.bf16.msra.mxu0 %v347
    %359 = vmatpush.bf16.msra.mxu0 %v346
    %360 = vmatpush.bf16.msra.mxu0 %v345
    %361 = vmatpush.bf16.msra.mxu0 %v344
    %362 = vmatpush.bf16.msra.mxu0 %v343
    %363 = vmatpush.bf16.msra.mxu0 %v342
    %364 = vmatpush.bf16.msra.mxu0 %v341
    %365 = vmatmul.bf16.gmra.mxu0 %v288
    %v366 = vpop.f32.mrf.mxu0
    %v367 = vadd.f32 %v307, %v366
    %v368 = vpop.f32.mrf.mxu0
    %v369 = vadd.f32 %v307, %v368
    %370 = vdwg.mxu0
    %v371 = vmax.f32 %v367, 0.0
    %v372 = vmax.f32 %v369, 0.0
    %v373 = vpack.c.bf16 %v372, %v371
    %v374 = vld [vmem:[#allocation10] sm:$0xf]
    %v375 = vld [vmem:[#allocation10 + $0x4] sm:$0xf]
    %v376 = vld [vmem:[#allocation10 + $0x8] sm:$0xf]
    %v377 = vld [vmem:[#allocation10 + $0xc] sm:$0xf]
    %v378 = vld [vmem:[#allocation10 + $0x10] sm:$0xf]
    %v379 = vld [vmem:[#allocation10 + $0x14] sm:$0xf]
    %v380 = vld [vmem:[#allocation10 + $0x18] sm:$0xf]
    %v381 = vld [vmem:[#allocation10 + $0x1c] sm:$0xf]
    %v382 = vld [vmem:[#allocation10 + $0x20] sm:$0xf]
    %v383 = vld [vmem:[#allocation10 + $0x24] sm:$0xf]
    %v384 = vld [vmem:[#allocation10 + $0x28] sm:$0xf]
    %v385 = vld [vmem:[#allocation10 + $0x2c] sm:$0xf]
    %v386 = vld [vmem:[#allocation10 + $0x30] sm:$0xf]
    %v387 = vld [vmem:[#allocation10 + $0x34] sm:$0xf]
    %v388 = vld [vmem:[#allocation10 + $0x38] sm:$0xf]
    %v389 = vld [vmem:[#allocation10 + $0x3c] sm:$0xf]
    %v390 = vld [vmem:[%s8] sm:$0x1]
    %v392 = vperm.slane %v390, 0
    %v410 = vunpack.c.l.b16 %v374
    %v411 = vunpack.c.l.b16 %v375
    %v412 = vunpack.c.l.b16 %v376
    %v413 = vunpack.c.l.b16 %v377
    %v414 = vunpack.c.l.b16 %v378
    %v415 = vunpack.c.l.b16 %v379
    %v416 = vunpack.c.l.b16 %v380
    %v417 = vunpack.c.l.b16 %v381
    %v418 = vunpack.c.l.b16 %v382
    %v419 = vunpack.c.l.b16 %v383
    %v420 = vunpack.c.l.b16 %v384
    %v421 = vunpack.c.l.b16 %v385
    %v422 = vunpack.c.l.b16 %v386
    %v423 = vunpack.c.l.b16 %v387
    %v424 = vunpack.c.l.b16 %v388
    %v425 = vunpack.c.l.b16 %v389
    %v426 = vpack.c.b16 %v411, %v410
    %v427 = vpack.c.b16 %v413, %v412
    %v428 = vpack.c.b16 %v415, %v414
    %v429 = vpack.c.b16 %v417, %v416
    %v430 = vpack.c.b16 %v419, %v418
    %v431 = vpack.c.b16 %v421, %v420
    %v432 = vpack.c.b16 %v423, %v422
    %v433 = vpack.c.b16 %v425, %v424
    %442 = vmatpush.bf16.msra.mxu0 %v433
    %443 = vmatpush.bf16.msra.mxu0 %v432
    %444 = vmatpush.bf16.msra.mxu0 %v431
    %445 = vmatpush.bf16.msra.mxu0 %v430
    %446 = vmatpush.bf16.msra.mxu0 %v429
    %447 = vmatpush.bf16.msra.mxu0 %v428
    %448 = vmatpush.bf16.msra.mxu0 %v427
    %449 = vmatpush.bf16.msra.mxu0 %v426
    %450 = vmatmul.bf16.gmra.mxu0 %v373
    %v451 = vpop.f32.mrf.mxu0
    %v452 = vadd.f32 %v392, %v451
    %v453 = vpop.f32.mrf.mxu0
    %v454 = vadd.f32 %v392, %v453
    %455 = vdwg.mxu0
    %456 = vst [vmem:[#allocation11] sm:$0xff] %v452
    %457 = vst [vmem:[#allocation11 + $0x8] sm:$0xff] %v454
    // Predicated region
    $region58: #{tpu_custom_call.1} parent=1 // pred_check
      _
    $region59: #{tpu_custom_call.1} parent=1 // pred_check_branch
      %459 = sbr.rel (0) target = $region61
    $region60: #{tpu_custom_call.1} parent=1 // pred_region
      %461 = vsyncadd [#allocation4], 0
      %s462 = sshll.u32 [#allocation11], 4
      %s463 = int_to_ptr.vmem [resolvable:$true] %s462
      %s464 = sshll.u32 %s9, 4
      %s465 = int_to_ptr.hbm [resolvable:$true] %s464
      %470 = dma.vmem_to_hbm [thread:$0]  %s463, 256, %s465, [#allocation4], 128, 128, 8
    $region61: #{tpu_custom_call.1} parent=1 // pred_fallthru
      _
    // Predicated region
    $region62: #{tpu_custom_call.1} parent=1 // pred_check
      _
    $region63: #{tpu_custom_call.1} parent=1 // pred_check_branch
      %472 = sbr.rel (0) target = $region65
    $region64: #{tpu_custom_call.1} parent=1 // pred_region
      %474 = dma.done [#allocation4], 256
    $region65: #{tpu_custom_call.1} parent=1 // pred_fallthru
      _
    %475 = vsyncpa [#allocation3], 1
    %476 = vsyncpa [#allocation6], 1
    %477 = vsyncpa [#allocation9], 1
    %478 = vsyncpa [#allocation4], 1

</llo_original>
